<compile_context>
chip_gen: v7x
topology: tpu7x:2x2x1
jax: 0.10.0
libtpu: 0.0.40
codegen_flags: <defaults>
</compile_context>

<pallas_src>
import math
from functools import partial

import jax
import jax.numpy as jnp
from jax.experimental import pallas as pl
from jax.experimental.pallas import tpu as pltpu


def _patch_embed_kernel(x_ref, w_ref, b_ref, o_ref):
    # x_ref: (TB, K)  w_ref: (K, N)  b_ref: (1, N)  o_ref: (TB, N)
    acc = jnp.dot(x_ref[...], w_ref[...], preferred_element_type=jnp.float32)
    o_ref[...] = (acc + b_ref[...]).astype(o_ref.dtype)


def init_patch_embed_params(w, b, *, num_patches, feature_size):
    """Build the resident block-diagonal weight and tiled bias ONCE (module init),
    so the per-forward path does no kron/tile dispatches."""
    embed_dim = w.shape[1]
    # kron(I_P, w) -> (num_patches*patch_size, num_patches*embed_dim); drop the
    # trailing rows that would only multiply the F.pad zeros of x.
    w_bd = jnp.kron(jnp.eye(num_patches, dtype=w.dtype), w)[:feature_size]
    b_full = jnp.tile(b, num_patches).reshape(1, num_patches * embed_dim)
    return w_bd, b_full


def _choose_row_tile(B, cap=2048):
    """Adaptive row tile: minimal padding waste, even grid for v7x dual-TC."""
    grid_n = pl.cdiv(B, cap)
    if grid_n == 1 and B > 1024:
        grid_n = 2                      # let both v7x TensorCores work
    if grid_n > 1 and grid_n % 2 == 1:
        grid_n += 1                     # even split across the two v7x TCs
    tb = max(8, ((pl.cdiv(B, grid_n) + 7) // 8) * 8)   # multiple of 8 sublanes
    return tb, pl.cdiv(B, tb)


@partial(jax.jit, static_argnames=("num_patches", "embed_dim"))
def patch_embeddings_forward(x, w_bd, b_full, *, num_patches, embed_dim):
    """x: (B, feature_size) f32; w_bd: (feature_size, P*E); b_full: (1, P*E)."""
    B, K = x.shape
    N = num_patches * embed_dim
    TB, grid_n = _choose_row_tile(B)

    out_flat = pl.pallas_call(
        _patch_embed_kernel,
        out_shape=jax.ShapeDtypeStruct((B, N), jnp.float32),
        grid=(grid_n,),
        in_specs=[
            pl.BlockSpec((TB, K), lambda i: (i, 0)),   # x rows stream through
            pl.BlockSpec((K, N), lambda i: (0, 0)),    # block-diag weight resident
            pl.BlockSpec((1, N), lambda i: (0, 0)),    # bias resident
        ],
        # Exact (B, N) output: last partial block is masked by Pallas, no pad/slice.
        out_specs=pl.BlockSpec((TB, N), lambda i: (i, 0)),
        compiler_params=pltpu.CompilerParams(
            dimension_semantics=("parallel",),          # shard row steps across TCs
        ),
    )(x, w_bd, b_full)

    return out_flat.reshape(B, num_patches, embed_dim)


def _reference(x, w, b, *, num_patches, patch_size, pad_size):
    B = x.shape[0]
    xp = jnp.pad(x, ((0, 0), (0, pad_size))).reshape(B, num_patches, patch_size)
    return xp @ w + b


if __name__ == "__main__":
    # Module config (matches __init__ semantics).
    feature_size = 60
    num_patches = 8
    embed_dim = 32
    patch_size = math.ceil(feature_size / num_patches)        # 8
    pad_size = num_patches * patch_size - feature_size        # 4

    key = jax.random.PRNGKey(0)
    kx, kw, kb, kx2, kx3 = jax.random.split(key, 5)

    # Deterministic nn.Linear-style init: U(-1/sqrt(in), 1/sqrt(in)).
    bound = 1.0 / math.sqrt(patch_size)
    w = jax.random.uniform(kw, (patch_size, embed_dim), jnp.float32, -bound, bound)
    b = jax.random.uniform(kb, (embed_dim,), jnp.float32, -bound, bound)

    # Hoisted once (module-init time), not per forward.
    w_bd, b_full = init_patch_embed_params(
        w, b, num_patches=num_patches, feature_size=feature_size)

    # Small demo batch (partial last block: 2 rows in an 8-row tile).
    B = 2
    x = jax.random.normal(kx, (B, feature_size), dtype=jnp.float32)
    out = patch_embeddings_forward(
        x, w_bd, b_full, num_patches=num_patches, embed_dim=embed_dim)
    jax.block_until_ready(out)
    ref = _reference(x, w, b, num_patches=num_patches,
                     patch_size=patch_size, pad_size=pad_size)
    assert out.shape == (B, num_patches, embed_dim)
    assert jnp.allclose(out, ref, atol=1e-5, rtol=1e-5)

    # Larger batch: 2-step even grid (520 rows per step), zero padding, no slice.
    B2 = 1040
    x2 = jax.random.normal(kx2, (B2, feature_size), dtype=jnp.float32)
    out2 = patch_embeddings_forward(
        x2, w_bd, b_full, num_patches=num_patches, embed_dim=embed_dim)
    jax.block_until_ready(out2)
    ref2 = _reference(x2, w, b, num_patches=num_patches,
                      patch_size=patch_size, pad_size=pad_size)
    assert out2.shape == (B2, num_patches, embed_dim)
    assert jnp.allclose(out2, ref2, atol=1e-5, rtol=1e-5)

    # Ragged batch exercising the masked tail of the final block (TB=336, B=333).
    B3 = 333
    x3 = jax.random.normal(kx3, (B3, feature_size), dtype=jnp.float32)
    out3 = patch_embeddings_forward(
        x3, w_bd, b_full, num_patches=num_patches, embed_dim=embed_dim)
    jax.block_until_ready(out3)
    ref3 = _reference(x3, w, b, num_patches=num_patches,
                      patch_size=patch_size, pad_size=pad_size)
    assert out3.shape == (B3, num_patches, embed_dim)
    assert jnp.allclose(out3, ref3, atol=1e-5, rtol=1e-5)

    # NOTE: dropout=0.25 is accepted by __init__ but never applied in forward -> omitted.
    print("KERNEL_OK")
</pallas_src>

<mosaic_0001>
module attributes {stable_mosaic.version = 11 : i64} {
  func.func @_patch_embed_kernel(%arg0: i32, %arg1: memref<8x60xf32, #tpu.memory_space<vmem>>, %arg2: memref<60x256xf32, #tpu.memory_space<vmem>>, %arg3: memref<1x256xf32, #tpu.memory_space<vmem>>, %arg4: memref<8x256xf32, #tpu.memory_space<vmem>>) attributes {dimension_semantics = [#tpu.dimension_semantics<parallel>], iteration_bounds = array<i64: 1>, scalar_prefetch = 0 : i64, scratch_operands = 0 : i64, tpu.core_type = #tpu.core_type<tc>, window_params = [{transform_indices = @transform_0, window_bounds = array<i64: 8, 60>}, {pipeline_mode = #tpu.pipeline_mode<synchronous>, transform_indices = @transform_1, window_bounds = array<i64: 60, 256>}, {pipeline_mode = #tpu.pipeline_mode<synchronous>, transform_indices = @transform_2, window_bounds = array<i64: 1, 256>}, {transform_indices = @transform_3, window_bounds = array<i64: 8, 256>}]} {
    %c0 = arith.constant 0 : index
    %c0_0 = arith.constant 0 : index
    %0 = vector.load %arg1[%c0, %c0_0] : memref<8x60xf32, #tpu.memory_space<vmem>>, vector<8x60xf32>
    %c0_1 = arith.constant 0 : index
    %c0_2 = arith.constant 0 : index
    %1 = vector.load %arg2[%c0_1, %c0_2] : memref<60x256xf32, #tpu.memory_space<vmem>>, vector<60x256xf32>
    %cst = arith.constant dense<0.000000e+00> : vector<8x256xf32>
    %2 = tpu.matmul %0, %1, %cst {dimension_numbers = #tpu.dot_dimension_numbers<[1], [0], [0], [1], [0, 0, 1, 1], [], []>} : vector<8x60xf32>, vector<60x256xf32>, vector<8x256xf32> -> vector<8x256xf32>
    %c0_3 = arith.constant 0 : index
    %c0_4 = arith.constant 0 : index
    %3 = vector.load %arg3[%c0_3, %c0_4] : memref<1x256xf32, #tpu.memory_space<vmem>>, vector<1x256xf32>
    %4 = vector.broadcast %3 : vector<1x256xf32> to vector<8x256xf32>
    %5 = arith.addf %2, %4 : vector<8x256xf32>
    %c0_5 = arith.constant 0 : index
    %c0_6 = arith.constant 0 : index
    %6 = vector.load %arg4[%c0_5, %c0_6] : memref<8x256xf32, #tpu.memory_space<vmem>>, vector<8x256xf32>
    tpu.vector_store %arg4[%c0_5, %c0_6], %5 {strides = array<i32>} : memref<8x256xf32, #tpu.memory_space<vmem>>, vector<8x256xf32>,
    return
  }
  func.func @transform_0(%arg0: i32) -> (i32, i32) {
    %c0_i32 = arith.constant 0 : i32
    %c0_i32_0 = arith.constant 0 : i32
    return %arg0, %c0_i32 : i32, i32
  }
  func.func @transform_1(%arg0: i32) -> (i32, i32) {
    %c0_i32 = arith.constant 0 : i32
    %c0_i32_0 = arith.constant 0 : i32
    %c0_i32_1 = arith.constant 0 : i32
    return %c0_i32, %c0_i32_0 : i32, i32
  }
  func.func @transform_2(%arg0: i32) -> (i32, i32) {
    %c0_i32 = arith.constant 0 : i32
    %c0_i32_0 = arith.constant 0 : i32
    %c0_i32_1 = arith.constant 0 : i32
    return %c0_i32, %c0_i32_0 : i32, i32
  }
  func.func @transform_3(%arg0: i32) -> (i32, i32) {
    %c0_i32 = arith.constant 0 : i32
    %c0_i32_0 = arith.constant 0 : i32
    return %arg0, %c0_i32 : i32, i32
  }
}

</mosaic_0001>

<llo_original>
// kernel: patch_embeddings_forward.1
$region0: #{patch_embeddings_forward.1}
  #allocation0 [shape = 'u32[]', space=smem, size = 0x4, offset = 0x4, fixed_abs, tag = 'smem constant byte address 0x4 - core index']
  #allocation1 [shape = 'u32[144,128]{1,0:T(1,128)}', space=vmem, size = 0x12000, scoped, tag = 'internal scratch']
  %s0 = inlined_call_operand.hbm [shape: f32[2,60], index: 0, kind: input, shape index: {}]
  %s1 = inlined_call_operand.hbm [shape: f32[60,256], index: 1, kind: input, shape index: {}]
  %s2 = inlined_call_operand.vmem [shape: f32[1,256], index: 2, kind: input, shape index: {}]
  %s3 = inlined_call_operand.vmem [shape: f32[2,256], index: 3, kind: output, shape index: {}]
  %s4 = sld [smem:[#allocation0]]
  $region60: #{patch_embeddings_forward.1} parent=0
    _
  %s6 = ssub.s32 1, %s4
  %s7 = scalar_select 0, %s6, %s4
  $region1: #{patch_embeddings_forward.1} parent=0
    #allocation2 [shape = 'u8[4096]{0}', space=vmem, size = 0x1000, scoped, tag = 'input window, operand 0, single buffered']
    #allocation3 [shape = 's32[1]{0}', space=sflag, size = 0x4, scoped, tag = 'scoped memory for patch_embeddings_forward.1']
    #allocation4 [shape = 'u8[65536]{0}', space=vmem, size = 0x10000, scoped, tag = 'input window, operand 1, single buffered']
    #allocation5 [shape = 's32[1]{0}', space=sflag, size = 0x4, scoped, tag = 'scoped memory for patch_embeddings_forward.1']
    #allocation6 [shape = 'u8[8192]{0}', space=vmem, size = 0x2000, scoped, tag = 'output window, operand 0, single buffered']
    %8 = vsyncpa [#allocation3], 0
    %9 = vsyncpa [#allocation5], 0
    // Predicated region
    $region2: #{patch_embeddings_forward.1} parent=1 // pred_check
      _
    $region3: #{patch_embeddings_forward.1} parent=1 // pred_check_branch
      %11 = sbr.rel (0) target = $region5
    $region4: #{patch_embeddings_forward.1} parent=1 // pred_region
      %s13 = ssub.s32 128, 32
      %14 = vsyncadd [#allocation3], %s13
      %s15 = sshll.u32 [#allocation2], 4
      %s16 = int_to_ptr.vmem [resolvable:$true] %s15
      %21 = dma.hbm_to_vmem [thread:$0]  %s0, 32, %s16, [#allocation3], 32, 32, 2
    $region5: #{patch_embeddings_forward.1} parent=1 // pred_fallthru
      _
    // Predicated region
    $region6: #{patch_embeddings_forward.1} parent=1 // pred_check
      _
    $region7: #{patch_embeddings_forward.1} parent=1 // pred_check_branch
      %23 = sbr.rel (0) target = $region9
    $region8: #{patch_embeddings_forward.1} parent=1 // pred_region
      %s25 = ssub.s32 2048, 2048
      %26 = vsyncadd [#allocation5], %s25
      %s27 = sshll.u32 [#allocation4], 4
      %s28 = int_to_ptr.vmem [resolvable:$true] %s27
      %33 = dma.hbm_to_vmem [thread:$0]  %s1, 2048, %s28, [#allocation5], 256, 256, 16
    $region9: #{patch_embeddings_forward.1} parent=1 // pred_fallthru
      _
    // Predicated region
    $region10: #{patch_embeddings_forward.1} parent=1 // pred_check
      _
    $region11: #{patch_embeddings_forward.1} parent=1 // pred_check_branch
      %35 = sbr.rel (0) target = $region13
    $region12: #{patch_embeddings_forward.1} parent=1 // pred_region
      _
    $region13: #{patch_embeddings_forward.1} parent=1 // pred_fallthru
      _
    // Predicated region
    $region14: #{patch_embeddings_forward.1} parent=1 // pred_check
      _
    $region15: #{patch_embeddings_forward.1} parent=1 // pred_check_branch
      %37 = sbr.rel (0) target = $region17
    $region16: #{patch_embeddings_forward.1} parent=1 // pred_region
      %38 = dma.done [#allocation3], 128
    $region17: #{patch_embeddings_forward.1} parent=1 // pred_fallthru
      _
    // Predicated region
    $region18: #{patch_embeddings_forward.1} parent=1 // pred_check
      _
    $region19: #{patch_embeddings_forward.1} parent=1 // pred_check_branch
      %40 = sbr.rel (0) target = $region21
    $region20: #{patch_embeddings_forward.1} parent=1 // pred_region
      %41 = dma.done [#allocation5], 2048
    $region21: #{patch_embeddings_forward.1} parent=1 // pred_fallthru
      _
    %v42 = vld [vmem:[#allocation2] sm:$0xff]
    %v43 = vld [vmem:[#allocation4] sm:$0xff]
    %v44 = vld [vmem:[#allocation4 + $0x8] sm:$0xff]
    %v45 = vld [vmem:[#allocation4 + $0x10] sm:$0xff]
    %v46 = vld [vmem:[#allocation4 + $0x18] sm:$0xff]
    %v47 = vld [vmem:[#allocation4 + $0x20] sm:$0xff]
    %v48 = vld [vmem:[#allocation4 + $0x28] sm:$0xff]
    %v49 = vld [vmem:[#allocation4 + $0x30] sm:$0xff]
    %v50 = vld [vmem:[#allocation4 + $0x38] sm:$0xff]
    %v51 = vld [vmem:[#allocation4 + $0x40] sm:$0xff]
    %v52 = vld [vmem:[#allocation4 + $0x48] sm:$0xff]
    %v53 = vld [vmem:[#allocation4 + $0x50] sm:$0xff]
    %v54 = vld [vmem:[#allocation4 + $0x58] sm:$0xff]
    %v55 = vld [vmem:[#allocation4 + $0x60] sm:$0xff]
    %v56 = vld [vmem:[#allocation4 + $0x68] sm:$0xff]
    %v57 = vld [vmem:[#allocation4 + $0x70] sm:$0xf]
    %v58 = vld [vmem:[#allocation4 + $0x78] sm:$0xf]
    %v59 = vld [vmem:[%s2] sm:$0x3]
    %v61 = vlaneseq
    %v62 = vshrl.u32 %v61, 7
    %v63 = vsub.s32 0, %v62
    %v64 = vrot.slane %v59, %v63
    %v65 = vlaneseq
    %v66 = vshrl.u32 %v65, 7
    %v67 = vsub.s32 1, %v66
    %v68 = vrot.slane %v59, %v67
    %vm71 = vcmask 490496
    %v73 = vsel %vm71, %v42, 0
    %vm75 = vcmask 1043456
    %v77 = vsel %vm75, %v57, 0
    %v80 = vsel %vm75, %v58, 0
    %82 = vmatprep.subr.mxu0 %v44
    %83 = vmatpush1.msra.mxu0 %v43
    %84 = vmatprep.subr.mxu0 %v46
    %85 = vmatpush1.msra.mxu0 %v45
    %86 = vmatprep.subr.mxu0 %v48
    %87 = vmatpush1.msra.mxu0 %v47
    %88 = vmatprep.subr.mxu0 %v50
    %89 = vmatpush1.msra.mxu0 %v49
    %90 = vmatprep.subr.mxu0 %v52
    %91 = vmatpush1.msra.mxu0 %v51
    %92 = vmatprep.subr.mxu0 %v54
    %93 = vmatpush1.msra.mxu0 %v53
    %94 = vmatprep.subr.mxu0 %v56
    %95 = vmatpush1.msra.mxu0 %v55
    %96 = vmatprep.subr.mxu0 %v80
    %97 = vmatpush1.msra.mxu0 %v77
    %98 = vmatprep.subr.mxu0 0.0
    %99 = vmatpush1.msra.mxu0 0.0
    %100 = vmatprep.subr.mxu0 0.0
    %101 = vmatpush1.msra.mxu0 0.0
    %102 = vmatprep.subr.mxu0 0.0
    %103 = vmatpush1.msra.mxu0 0.0
    %104 = vmatprep.subr.mxu0 0.0
    %105 = vmatpush1.msra.mxu0 0.0
    %106 = vmatprep.subr.mxu0 0.0
    %107 = vmatpush1.msra.mxu0 0.0
    %108 = vmatprep.subr.mxu0 0.0
    %109 = vmatpush1.msra.mxu0 0.0
    %110 = vmatprep.subr.mxu0 0.0
    %111 = vmatpush1.msra.mxu0 0.0
    %112 = vmatprep.subr.mxu0 0.0
    %113 = vmatpush1.msra.mxu0 0.0
    %114 = vmatprep.subr.mxu0 0.0
    %115 = vmatpush1.msra.mxu0 0.0
    %116 = vmatprep.subr.mxu0 0.0
    %117 = vmatpush1.msra.mxu0 0.0
    %118 = vmatprep.subr.mxu0 0.0
    %119 = vmatpush1.msra.mxu0 0.0
    %120 = vmatprep.subr.mxu0 0.0
    %121 = vmatpush1.msra.mxu0 0.0
    %122 = vmatprep.subr.mxu0 0.0
    %123 = vmatpush1.msra.mxu0 0.0
    %124 = vmatprep.subr.mxu0 0.0
    %125 = vmatpush1.msra.mxu0 0.0
    %126 = vmatprep.subr.mxu0 0.0
    %127 = vmatpush1.msra.mxu0 0.0
    %128 = vmatprep.subr.mxu0 0.0
    %129 = vmatpush1.msra.mxu0 0.0
    %130 = vmatprep.subr.mxu0 0.0
    %131 = vmatpush1.msra.mxu0 0.0
    %132 = vmatprep.subr.mxu0 0.0
    %133 = vmatpush1.msra.mxu0 0.0
    %134 = vmatprep.subr.mxu0 0.0
    %135 = vmatpush1.msra.mxu0 0.0
    %136 = vmatprep.subr.mxu0 0.0
    %137 = vmatpush1.msra.mxu0 0.0
    %138 = vmatprep.subr.mxu0 0.0
    %139 = vmatpush1.msra.mxu0 0.0
    %140 = vmatprep.subr.mxu0 0.0
    %141 = vmatpush1.msra.mxu0 0.0
    %142 = vmatprep.subr.mxu0 0.0
    %143 = vmatpush1.msra.mxu0 0.0
    %144 = vmatprep.subr.mxu0 0.0
    %145 = vmatpush1.msra.mxu0 0.0
    %146 = vmatprep.mubr.f32.mxu0 0.0
    %147 = vmatmul.mubr.f32.gmra.mrb[0].mxu0 %v73
    %v148 = vpop.f32.mrb[0].mxu0
    %v149 = vadd.f32 %v64, %v148
    %v150 = vpop.f32.mrb[0].mxu0
    %v151 = vadd.f32 %v68, %v150
    %152 = vdwg.mxu0
    %v155 = vcombine.low %v149, %v151
    %v156 = vcombine.high %v149, %v151
    %v158 = vunpack.c.l.s4 1983009808
    %v159 = vunpack.c.0.s8 %v158
    %v160 = vlaneseq
    %v161 = vshrl.u32 %v160, 7
    %v162 = vsub.s32 %v159, %v161
    %v163 = vrot.slane %v155, %v162
    %v165 = vunpack.c.l.s4 1983009808
    %v166 = vunpack.c.0.s8 %v165
    %v167 = vlaneseq
    %v168 = vshrl.u32 %v167, 7
    %v169 = vsub.s32 %v166, %v168
    %v170 = vrot.slane %v156, %v169
    %v171 = vcombine.high %v163, %v163
    %v172 = vcombine.high %v170, %v170
    %177 = vst [vmem:[#allocation6] sm:$0xf] %v163
    %178 = vst [vmem:[#allocation6 + $0x4] sm:$0xf] %v171
    %179 = vst [vmem:[#allocation6 + $0x8] sm:$0xf] %v170
    %180 = vst [vmem:[#allocation6 + $0xc] sm:$0xf] %v172
    // Predicated region
    $region22: #{patch_embeddings_forward.1} parent=1 // pred_check
      _
    $region23: #{patch_embeddings_forward.1} parent=1 // pred_check_branch
      %182 = sbr.rel (0) target = $region25
    $region24: #{patch_embeddings_forward.1} parent=1 // pred_region
      // Predicated region
      $region26: #{patch_embeddings_forward.1} parent=24 // pred_check
        _
      $region27: #{patch_embeddings_forward.1} parent=24 // pred_check_branch
        %184 = sbr.rel (0) target = $region29
      $region28: #{patch_embeddings_forward.1} parent=24 // pred_region
        // Predicated region
        $region30: #{patch_embeddings_forward.1} parent=28 // pred_check
          _
        $region31: #{patch_embeddings_forward.1} parent=28 // pred_check_branch
          %186 = sbr.rel target = $region33
        $region32: #{patch_embeddings_forward.1} parent=28 // pred_region
          // Predicated region
          $region45: #{patch_embeddings_forward.1} parent=32 // pred_check
            _
          $region46: #{patch_embeddings_forward.1} parent=32 // pred_check_branch
            %201 = sbr.rel (0) target = $region48
          $region47: #{patch_embeddings_forward.1} parent=32 // pred_region
            loop: start=0, step=1, limit=1
            $region49: #{patch_embeddings_forward.1} parent=47 // loop_pre_header
              _
            $region50: #{patch_embeddings_forward.1} parent=47 // loop_header
              %s204 = sphi 0, %s208
              %p205 = scmp.ge.s32.totalorder %s204, 1
              %s209 = sphi [#allocation6], [#allocation6]
              %s210 = sphi %s3, %s3
            $region51: #{patch_embeddings_forward.1} parent=47 // loop_header_branch
              %207 = sbr.rel (%p205) target = $region55
            $region52: #{patch_embeddings_forward.1} parent=47 // loop_body
              %v211 = vld [vmem:[%s209] sm:$0xf]
              %212 = vst [vmem:[%s210] sm:$0xf] %v211
            $region53: #{patch_embeddings_forward.1} parent=47 // loop_footer
              %s208 = sadd.s32 1, %s204
            $region54: #{patch_embeddings_forward.1} parent=47 // loop_footer_branch
              %203 = sbr.rel target = $region50
            $region55: #{patch_embeddings_forward.1} parent=47 // loop_exit
              _
          $region48: #{patch_embeddings_forward.1} parent=32 // pred_fallthru
            _
        $region33: #{patch_embeddings_forward.1} parent=28 // pred_fallthru
          _
        // Predicated region
        $region34: #{patch_embeddings_forward.1} parent=28 // pred_check
          _
        $region35: #{patch_embeddings_forward.1} parent=28 // pred_check_branch
          %188 = sbr.rel (0) target = $region37
        $region36: #{patch_embeddings_forward.1} parent=28 // pred_region
          loop: start=0, step=1, limit=1
          $region38: #{patch_embeddings_forward.1} parent=36 // loop_pre_header
            _
          $region39: #{patch_embeddings_forward.1} parent=36 // loop_header
            %s191 = sphi 0, %s195
            %p192 = scmp.ge.s32.totalorder %s191, 1
            %s196 = sphi [#allocation6], [#allocation6]
            %s197 = sphi %s3, %s3
          $region40: #{patch_embeddings_forward.1} parent=36 // loop_header_branch
            %194 = sbr.rel (%p192) target = $region44
          $region41: #{patch_embeddings_forward.1} parent=36 // loop_body
            %v198 = vld [vmem:[%s196] sm:$0xf]
            %199 = vst [vmem:[%s197] sm:$0xf] %v198
          $region42: #{patch_embeddings_forward.1} parent=36 // loop_footer
            %s195 = sadd.s32 1, %s191
          $region43: #{patch_embeddings_forward.1} parent=36 // loop_footer_branch
            %190 = sbr.rel target = $region39
          $region44: #{patch_embeddings_forward.1} parent=36 // loop_exit
            _
        $region37: #{patch_embeddings_forward.1} parent=28 // pred_fallthru
          _
      $region29: #{patch_embeddings_forward.1} parent=24 // pred_fallthru
        _
      %213 = vnop
    $region25: #{patch_embeddings_forward.1} parent=1 // pred_fallthru
      _
    // Predicated region
    $region56: #{patch_embeddings_forward.1} parent=1 // pred_check
      _
    $region57: #{patch_embeddings_forward.1} parent=1 // pred_check_branch
      %215 = sbr.rel (0) target = $region59
    $region58: #{patch_embeddings_forward.1} parent=1 // pred_region
      _
    $region59: #{patch_embeddings_forward.1} parent=1 // pred_fallthru
      _
    %216 = vsyncpa [#allocation3], 1
    %217 = vsyncpa [#allocation5], 1

</llo_original>
